<compile_context>
chip_gen: v7x
topology: tpu7x:2x2x1
jax: 0.10.0
libtpu: 0.0.40
codegen_flags: <defaults>
</compile_context>

<pallas_src>
from functools import partial

import jax
import jax.numpy as jnp
from jax.experimental import pallas as pl
from jax.experimental.pallas import tpu as pltpu


def _round_up(x: int, m: int) -> int:
    return ((x + m - 1) // m) * m


def _tsk_kernel(xt_ref, w2_ref, a_ref, out_ref):
    """One batch tile. xt: (F_pad, TN) with a ones row; everything lane-dense."""
    xt = xt_ref[...]                                   # (F_pad, TN)
    w2 = w2_ref[...]                                   # (2*R_pad, F_pad) stationary
    a = a_ref[...]                                     # (R_pad, F_pad)   stationary
    r_pad = a.shape[0]

    # Two MXU matmuls total; c and bias are folded into the ones row of xt,
    # and the ones row contributes nothing to the quadratic term (a[:, F] = 0).
    lin = jnp.dot(w2, xt, preferred_element_type=jnp.float32)        # (2R_pad, TN)
    quad = jnp.dot(a, xt * xt, preferred_element_type=jnp.float32)   # (R_pad, TN)

    z = quad + lin[:r_pad]                             # gaussian exponent, (R_pad, TN)
    conq = lin[r_pad:]                                 # first-order consequent

    # Stability shift (cancels exactly in the normalization): guarantees
    # den >= 1.  Padded rules carry z = 1e30 -> exp() == 0 -> they drop out.
    z = z - jnp.min(z, axis=0, keepdims=True)
    rule = jnp.exp(-z)                                 # (R_pad, TN)
    # PyTorch adds 10**(-538), which underflows to exactly 0.0 -> no-op; omitted.

    num = jnp.sum(rule * conq, axis=0, keepdims=True)  # (1, TN)
    den = jnp.sum(rule, axis=0, keepdims=True)         # (1, TN)

    # EUP approximate reciprocal (otherwise-idle slot) + one Newton step.
    inv = pl.reciprocal(den, approx=True)
    inv = inv * (2.0 - den * inv)
    out_ref[...] = num * inv                           # lane-dense (1, TN) store


@partial(jax.jit, static_argnames=("max_tile_n",))
def bp_fnn_s_forward(data, para_mu, para_sigma, para_w3, *, max_tile_n=8192):
    """Pallas forward for BP_FNN_S.  data: (N, F) -> (N,) float32."""
    data = jnp.asarray(data, jnp.float32)
    para_mu = jnp.asarray(para_mu, jnp.float32)
    para_sigma = jnp.asarray(para_sigma, jnp.float32)
    para_w3 = jnp.asarray(para_w3, jnp.float32)

    N, F = data.shape
    R = para_mu.shape[0]
    R_pad = _round_up(R, 8)
    F_pad = _round_up(F + 1, 8)     # +1: ones row carrying the c / bias constants
    ONE = F                         # row index of the ones row / constants column

    # ---- batch-tile selection: big, balanced, lane-aligned tiles ----
    N_lanes = _round_up(N, 128)
    min_tiles = 2 if N_lanes > 128 else 1       # v7x: keep both TensorCores busy
    n_tiles = max(pl.cdiv(N_lanes, max_tile_n), min_tiles)
    TN = _round_up(pl.cdiv(N_lanes, n_tiles), 128)
    n_tiles = pl.cdiv(N_lanes, TN)              # boundary blocks handled by Pallas

    # ---- parameter-only math hoisted out of the kernel (O(R*F), jit-fused) ----
    a = 1.0 / (2.0 * para_sigma * para_sigma)                  # (R, F)
    c = jnp.sum(para_mu * para_mu * a, axis=1)                 # (R,)
    a_pad = jnp.zeros((R_pad, F_pad), jnp.float32).at[:R, :F].set(a)
    w2 = jnp.zeros((2 * R_pad, F_pad), jnp.float32)
    w2 = w2.at[:R, :F].set(-2.0 * para_mu * a)
    w2 = w2.at[:R, ONE].set(c)
    if R_pad > R:
        w2 = w2.at[R:R_pad, ONE].set(1e30)      # dead padded rules -> exp(-1e30) = 0
    w2 = w2.at[R_pad:R_pad + R, :F].set(para_w3[:, 1:])
    w2 = w2.at[R_pad:R_pad + R, ONE].set(para_w3[:, 0])

    # ---- activation relayout: batch onto the lane axis (single fused XLA pass) ----
    xt = jnp.zeros((F_pad, N_lanes), jnp.float32)
    xt = xt.at[:F, :N].set(data.T)
    xt = xt.at[ONE, :].set(1.0)

    out = pl.pallas_call(
        _tsk_kernel,
        out_shape=jax.ShapeDtypeStruct((1, N_lanes), jnp.float32),
        grid_spec=pltpu.PrefetchScalarGridSpec(
            num_scalar_prefetch=0,
            grid=(n_tiles,),
            in_specs=[
                pl.BlockSpec((F_pad, TN), lambda i: (0, i)),          # activations
                pl.BlockSpec((2 * R_pad, F_pad), lambda i: (0, 0)),   # stationary
                pl.BlockSpec((R_pad, F_pad), lambda i: (0, 0)),       # stationary
            ],
            out_specs=pl.BlockSpec((1, TN), lambda i: (0, i)),        # lane-dense out
        ),
        compiler_params=pltpu.CompilerParams(
            # Independent batch tiles: shard across v7x's two TensorCores.
            dimension_semantics=("parallel",),
        ),
    )(xt, w2, a_pad)

    return out[0, :N]


def bp_fnn_s_reference(data, para_mu, para_sigma, para_w3):
    """Pure-JAX reference mirroring the PyTorch forward exactly."""
    fuzz = jnp.exp(-(data[:, None, :] - para_mu[None]) ** 2
                   / (2.0 * para_sigma[None] ** 2))              # (N, R, F)
    rule = jnp.prod(fuzz, axis=2)                                # (N, R)
    inv_frn = 1.0 / jnp.sum(rule, axis=1, keepdims=True)         # (N, 1)
    norm = rule * inv_frn
    conq = para_w3[:, 0][None] + jnp.sum(
        para_w3[None, :, 1:] * data[:, None, :], axis=2)         # (N, R)
    return jnp.sum(norm * conq, axis=1)                          # (N,)


if __name__ == "__main__":
    n_rules, n_fea, batch = 16, 4, 8

    key = jax.random.PRNGKey(0)
    k_mu, k_sigma, k_w3, k_x, k_x2 = jax.random.split(key, 5)

    # torch.rand-style uniform init; sigma kept away from 0 (sigma ~ 0 makes
    # 1/(2*sigma^2) blow up in any implementation, including the reference).
    para_mu = jax.random.uniform(k_mu, (n_rules, n_fea), dtype=jnp.float32)
    para_sigma = 0.5 + 0.5 * jax.random.uniform(
        k_sigma, (n_rules, n_fea), dtype=jnp.float32)
    para_w3 = jax.random.uniform(k_w3, (n_rules, n_fea + 1), dtype=jnp.float32)

    data = jax.random.uniform(k_x, (batch, n_fea), dtype=jnp.float32)

    out = jax.block_until_ready(
        bp_fnn_s_forward(data, para_mu, para_sigma, para_w3))

    # PyTorch's NaN check is a host-side print; mirrored here in the wrapper.
    if bool(jnp.any(jnp.isnan(out))):
        print("there is some dirty data in the final result")

    ref = bp_fnn_s_reference(data, para_mu, para_sigma, para_w3)
    assert out.shape == (batch,)
    assert jnp.allclose(out, ref, rtol=1e-4, atol=1e-4), (out, ref)

    # Second small check exercising the multi-tile path (>=2 tiles, boundary block).
    data2 = jax.random.uniform(k_x2, (300, n_fea), dtype=jnp.float32)
    out2 = jax.block_until_ready(
        bp_fnn_s_forward(data2, para_mu, para_sigma, para_w3))
    ref2 = bp_fnn_s_reference(data2, para_mu, para_sigma, para_w3)
    assert out2.shape == (300,)
    assert jnp.allclose(out2, ref2, rtol=1e-4, atol=1e-4)

    print("KERNEL_OK")
</pallas_src>

<mosaic_0001>
module attributes {stable_mosaic.version = 11 : i64} {
  func.func @_tsk_kernel(%arg0: i32, %arg1: memref<8x128xf32, #tpu.memory_space<vmem>>, %arg2: memref<32x8xf32, #tpu.memory_space<vmem>>, %arg3: memref<16x8xf32, #tpu.memory_space<vmem>>, %arg4: memref<1x128xf32, #tpu.memory_space<vmem>>) attributes {dimension_semantics = [#tpu.dimension_semantics<parallel>], iteration_bounds = array<i64: 1>, scalar_prefetch = 0 : i64, scratch_operands = 0 : i64, tpu.core_type = #tpu.core_type<tc>, window_params = [{transform_indices = @transform_0, window_bounds = array<i64: 8, 128>}, {pipeline_mode = #tpu.pipeline_mode<synchronous>, transform_indices = @transform_1, window_bounds = array<i64: 32, 8>}, {pipeline_mode = #tpu.pipeline_mode<synchronous>, transform_indices = @transform_2, window_bounds = array<i64: 16, 8>}, {transform_indices = @transform_3, window_bounds = array<i64: 1, 128>}]} {
    %c0 = arith.constant 0 : index
    %c0_0 = arith.constant 0 : index
    %0 = vector.load %arg1[%c0, %c0_0] : memref<8x128xf32, #tpu.memory_space<vmem>>, vector<8x128xf32>
    %c0_1 = arith.constant 0 : index
    %c0_2 = arith.constant 0 : index
    %1 = vector.load %arg2[%c0_1, %c0_2] : memref<32x8xf32, #tpu.memory_space<vmem>>, vector<32x8xf32>
    %c0_3 = arith.constant 0 : index
    %c0_4 = arith.constant 0 : index
    %2 = vector.load %arg3[%c0_3, %c0_4] : memref<16x8xf32, #tpu.memory_space<vmem>>, vector<16x8xf32>
    %cst = arith.constant dense<0.000000e+00> : vector<32x128xf32>
    %3 = tpu.matmul %1, %0, %cst {dimension_numbers = #tpu.dot_dimension_numbers<[1], [0], [0], [1], [0, 0, 1, 1], [], []>} : vector<32x8xf32>, vector<8x128xf32>, vector<32x128xf32> -> vector<32x128xf32>
    %4 = arith.mulf %0, %0 : vector<8x128xf32>
    %cst_5 = arith.constant dense<0.000000e+00> : vector<16x128xf32>
    %5 = tpu.matmul %2, %4, %cst_5 {dimension_numbers = #tpu.dot_dimension_numbers<[1], [0], [0], [1], [0, 0, 1, 1], [], []>} : vector<16x8xf32>, vector<8x128xf32>, vector<16x128xf32> -> vector<16x128xf32>
    %6 = vector.extract_strided_slice %3 {offsets = [0, 0], sizes = [16, 128], strides = [1, 1]} : vector<32x128xf32> to vector<16x128xf32>
    %7 = arith.addf %5, %6 : vector<16x128xf32>
    %8 = vector.extract_strided_slice %3 {offsets = [16, 0], sizes = [16, 128], strides = [1, 1]} : vector<32x128xf32> to vector<16x128xf32>
    %cst_6 = arith.constant dense<0x7F800000> : vector<128xf32>
    %9 = vector.multi_reduction <minimumf>, %7, %cst_6 [0] : vector<16x128xf32> to vector<128xf32>
    %10 = vector.shape_cast %9 : vector<128xf32> to vector<1x128xf32>
    %11 = vector.broadcast %10 : vector<1x128xf32> to vector<16x128xf32>
    %12 = arith.subf %7, %11 : vector<16x128xf32>
    %cst_7 = arith.constant 0.000000e+00 : f32
    %13 = vector.broadcast %cst_7 : f32 to vector<16x128xf32>
    %14 = arith.subf %13, %12 : vector<16x128xf32>
    %15 = math.exp %14 : vector<16x128xf32>
    %16 = arith.mulf %15, %8 : vector<16x128xf32>
    %cst_8 = arith.constant dense<0.000000e+00> : vector<128xf32>
    %17 = vector.multi_reduction <add>, %16, %cst_8 [0] : vector<16x128xf32> to vector<128xf32>
    %18 = vector.shape_cast %17 : vector<128xf32> to vector<1x128xf32>
    %cst_9 = arith.constant dense<0.000000e+00> : vector<128xf32>
    %19 = vector.multi_reduction <add>, %15, %cst_9 [0] : vector<16x128xf32> to vector<128xf32>
    %20 = vector.shape_cast %19 : vector<128xf32> to vector<1x128xf32>
    %21 = tpu.reciprocal %20 {approx = true} : vector<1x128xf32> -> vector<1x128xf32>
    %22 = arith.mulf %20, %21 : vector<1x128xf32>
    %cst_10 = arith.constant 2.000000e+00 : f32
    %23 = vector.broadcast %cst_10 : f32 to vector<1x128xf32>
    %24 = arith.subf %23, %22 : vector<1x128xf32>
    %25 = arith.mulf %21, %24 : vector<1x128xf32>
    %26 = arith.mulf %18, %25 : vector<1x128xf32>
    %c0_11 = arith.constant 0 : index
    %c0_12 = arith.constant 0 : index
    %27 = vector.load %arg4[%c0_11, %c0_12] : memref<1x128xf32, #tpu.memory_space<vmem>>, vector<1x128xf32>
    tpu.vector_store %arg4[%c0_11, %c0_12], %26 {strides = array<i32>} : memref<1x128xf32, #tpu.memory_space<vmem>>, vector<1x128xf32>,
    return
  }
  func.func @transform_0(%arg0: i32) -> (i32, i32) {
    %c0_i32 = arith.constant 0 : i32
    %c0_i32_0 = arith.constant 0 : i32
    return %c0_i32, %arg0 : i32, i32
  }
  func.func @transform_1(%arg0: i32) -> (i32, i32) {
    %c0_i32 = arith.constant 0 : i32
    %c0_i32_0 = arith.constant 0 : i32
    %c0_i32_1 = arith.constant 0 : i32
    return %c0_i32, %c0_i32_0 : i32, i32
  }
  func.func @transform_2(%arg0: i32) -> (i32, i32) {
    %c0_i32 = arith.constant 0 : i32
    %c0_i32_0 = arith.constant 0 : i32
    %c0_i32_1 = arith.constant 0 : i32
    return %c0_i32, %c0_i32_0 : i32, i32
  }
  func.func @transform_3(%arg0: i32) -> (i32, i32) {
    %c0_i32 = arith.constant 0 : i32
    %c0_i32_0 = arith.constant 0 : i32
    return %c0_i32, %arg0 : i32, i32
  }
}

</mosaic_0001>

<llo_original>
// kernel: bp_fnn_s_forward.1
$region0: #{bp_fnn_s_forward.1}
  #allocation0 [shape = 'u32[]', space=smem, size = 0x4, offset = 0x4, fixed_abs, tag = 'smem constant byte address 0x4 - core index']
  #allocation1 [shape = 'u32[144,128]{1,0:T(1,128)}', space=vmem, size = 0x12000, scoped, tag = 'internal scratch']
  %s0 = inlined_call_operand.vmem [shape: f32[8,128], index: 0, kind: input, shape index: {}]
  %s1 = inlined_call_operand.vmem [shape: f32[32,8], index: 1, kind: input, shape index: {}]
  %s2 = inlined_call_operand.vmem [shape: f32[16,8], index: 2, kind: input, shape index: {}]
  %s3 = inlined_call_operand.vmem [shape: f32[1,128], index: 3, kind: output, shape index: {}]
  %s4 = sld [smem:[#allocation0]]
  $region22: #{bp_fnn_s_forward.1} parent=0
    _
  %s6 = ssub.s32 1, %s4
  %s7 = scalar_select 0, %s6, %s4
  // Predicated region
  $region2: #{bp_fnn_s_forward.1} parent=0 // pred_check
    _
  $region3: #{bp_fnn_s_forward.1} parent=0 // pred_check_branch
    %9 = sbr.rel (0) target = $region5
  $region4: #{bp_fnn_s_forward.1} parent=0 // pred_region
    _
  $region5: #{bp_fnn_s_forward.1} parent=0 // pred_fallthru
    _
  // Predicated region
  $region6: #{bp_fnn_s_forward.1} parent=0 // pred_check
    _
  $region7: #{bp_fnn_s_forward.1} parent=0 // pred_check_branch
    %11 = sbr.rel (0) target = $region9
  $region8: #{bp_fnn_s_forward.1} parent=0 // pred_region
    _
  $region9: #{bp_fnn_s_forward.1} parent=0 // pred_fallthru
    _
  // Predicated region
  $region10: #{bp_fnn_s_forward.1} parent=0 // pred_check
    _
  $region11: #{bp_fnn_s_forward.1} parent=0 // pred_check_branch
    %13 = sbr.rel (0) target = $region13
  $region12: #{bp_fnn_s_forward.1} parent=0 // pred_region
    _
  $region13: #{bp_fnn_s_forward.1} parent=0 // pred_fallthru
    _
  %v14 = vld [vmem:[%s0] sm:$0xff]
  %v15 = vld [vmem:[%s1] sm:$0xff]
  %v16 = vld [vmem:[%s1 + $0x8] sm:$0xff]
  %v17 = vld [vmem:[%s1 + $0x10] sm:$0xff]
  %v18 = vld [vmem:[%s1 + $0x18] sm:$0xff]
  %v19 = vld [vmem:[%s2] sm:$0xff]
  %v20 = vld [vmem:[%s2 + $0x8] sm:$0xff]
  %vm21 = vcmask 64512
  %v23 = vsel %vm21, %v15, 0
  %v26 = vsel %vm21, %v16, 0
  %v29 = vsel %vm21, %v17, 0
  %v32 = vsel %vm21, %v18, 0
  %34 = vmatprep.subr.mxu0 0.0
  %35 = vmatpush1.msra.mxu0 %v14
  %36 = vmatprep.subr.mxu0 0.0
  %37 = vmatpush1.msra.mxu0 0.0
  %38 = vmatprep.subr.mxu0 0.0
  %39 = vmatpush1.msra.mxu0 0.0
  %40 = vmatprep.subr.mxu0 0.0
  %41 = vmatpush1.msra.mxu0 0.0
  %42 = vmatprep.subr.mxu0 0.0
  %43 = vmatpush1.msra.mxu0 0.0
  %44 = vmatprep.subr.mxu0 0.0
  %45 = vmatpush1.msra.mxu0 0.0
  %46 = vmatprep.subr.mxu0 0.0
  %47 = vmatpush1.msra.mxu0 0.0
  %48 = vmatprep.subr.mxu0 0.0
  %49 = vmatpush1.msra.mxu0 0.0
  %50 = vmatprep.subr.mxu0 0.0
  %51 = vmatpush1.msra.mxu0 0.0
  %52 = vmatprep.subr.mxu0 0.0
  %53 = vmatpush1.msra.mxu0 0.0
  %54 = vmatprep.subr.mxu0 0.0
  %55 = vmatpush1.msra.mxu0 0.0
  %56 = vmatprep.subr.mxu0 0.0
  %57 = vmatpush1.msra.mxu0 0.0
  %58 = vmatprep.subr.mxu0 0.0
  %59 = vmatpush1.msra.mxu0 0.0
  %60 = vmatprep.subr.mxu0 0.0
  %61 = vmatpush1.msra.mxu0 0.0
  %62 = vmatprep.subr.mxu0 0.0
  %63 = vmatpush1.msra.mxu0 0.0
  %64 = vmatprep.subr.mxu0 0.0
  %65 = vmatpush1.msra.mxu0 0.0
  %66 = vmatprep.subr.mxu0 0.0
  %67 = vmatpush1.msra.mxu0 0.0
  %68 = vmatprep.subr.mxu0 0.0
  %69 = vmatpush1.msra.mxu0 0.0
  %70 = vmatprep.subr.mxu0 0.0
  %71 = vmatpush1.msra.mxu0 0.0
  %72 = vmatprep.subr.mxu0 0.0
  %73 = vmatpush1.msra.mxu0 0.0
  %74 = vmatprep.subr.mxu0 0.0
  %75 = vmatpush1.msra.mxu0 0.0
  %76 = vmatprep.subr.mxu0 0.0
  %77 = vmatpush1.msra.mxu0 0.0
  %78 = vmatprep.subr.mxu0 0.0
  %79 = vmatpush1.msra.mxu0 0.0
  %80 = vmatprep.subr.mxu0 0.0
  %81 = vmatpush1.msra.mxu0 0.0
  %82 = vmatprep.subr.mxu0 0.0
  %83 = vmatpush1.msra.mxu0 0.0
  %84 = vmatprep.subr.mxu0 0.0
  %85 = vmatpush1.msra.mxu0 0.0
  %86 = vmatprep.subr.mxu0 0.0
  %87 = vmatpush1.msra.mxu0 0.0
  %88 = vmatprep.subr.mxu0 0.0
  %89 = vmatpush1.msra.mxu0 0.0
  %90 = vmatprep.subr.mxu0 0.0
  %91 = vmatpush1.msra.mxu0 0.0
  %92 = vmatprep.subr.mxu0 0.0
  %93 = vmatpush1.msra.mxu0 0.0
  %94 = vmatprep.subr.mxu0 0.0
  %95 = vmatpush1.msra.mxu0 0.0
  %96 = vmatprep.subr.mxu0 0.0
  %97 = vmatpush1.msra.mxu0 0.0
  %98 = vmatprep.mubr.f32.mxu0 0.0
  %99 = vmatmul.mubr.f32.gmra.mrb[0].mxu0 %v23
  %v100 = vpop.f32.mrb[0].mxu0
  %v101 = vadd.f32 0.0, %v100
  %v102 = vpop.f32.mrb[0].mxu0
  %103 = vmatprep.mubr.f32.mxu0 0.0
  %104 = vmatmul.mubr.f32.gmra.mrb[0].mxu0 %v26
  %v105 = vpop.f32.mrb[0].mxu0
  %v106 = vadd.f32 0.0, %v105
  %v107 = vpop.f32.mrb[0].mxu0
  %108 = vmatprep.mubr.f32.mxu0 0.0
  %109 = vmatmul.mubr.f32.gmra.mrb[0].mxu0 %v29
  %v110 = vpop.f32.mrb[0].mxu0
  %v111 = vadd.f32 0.0, %v110
  %v112 = vpop.f32.mrb[0].mxu0
  %113 = vmatprep.mubr.f32.mxu0 0.0
  %114 = vmatmul.mubr.f32.gmra.mrb[0].mxu0 %v32
  %v115 = vpop.f32.mrb[0].mxu0
  %v116 = vadd.f32 0.0, %v115
  %v117 = vpop.f32.mrb[0].mxu0
  %118 = vdwg.mxu0
  %v119 = vmul.f32 %v14, %v14
  %v121 = vsel %vm21, %v19, 0
  %v124 = vsel %vm21, %v20, 0
  %126 = vmatprep.subr.mxu0 0.0
  %127 = vmatpush1.msra.mxu0 %v119
  %128 = vmatprep.subr.mxu0 0.0
  %129 = vmatpush1.msra.mxu0 0.0
  %130 = vmatprep.subr.mxu0 0.0
  %131 = vmatpush1.msra.mxu0 0.0
  %132 = vmatprep.subr.mxu0 0.0
  %133 = vmatpush1.msra.mxu0 0.0
  %134 = vmatprep.subr.mxu0 0.0
  %135 = vmatpush1.msra.mxu0 0.0
  %136 = vmatprep.subr.mxu0 0.0
  %137 = vmatpush1.msra.mxu0 0.0
  %138 = vmatprep.subr.mxu0 0.0
  %139 = vmatpush1.msra.mxu0 0.0
  %140 = vmatprep.subr.mxu0 0.0
  %141 = vmatpush1.msra.mxu0 0.0
  %142 = vmatprep.subr.mxu0 0.0
  %143 = vmatpush1.msra.mxu0 0.0
  %144 = vmatprep.subr.mxu0 0.0
  %145 = vmatpush1.msra.mxu0 0.0
  %146 = vmatprep.subr.mxu0 0.0
  %147 = vmatpush1.msra.mxu0 0.0
  %148 = vmatprep.subr.mxu0 0.0
  %149 = vmatpush1.msra.mxu0 0.0
  %150 = vmatprep.subr.mxu0 0.0
  %151 = vmatpush1.msra.mxu0 0.0
  %152 = vmatprep.subr.mxu0 0.0
  %153 = vmatpush1.msra.mxu0 0.0
  %154 = vmatprep.subr.mxu0 0.0
  %155 = vmatpush1.msra.mxu0 0.0
  %156 = vmatprep.subr.mxu0 0.0
  %157 = vmatpush1.msra.mxu0 0.0
  %158 = vmatprep.subr.mxu0 0.0
  %159 = vmatpush1.msra.mxu0 0.0
  %160 = vmatprep.subr.mxu0 0.0
  %161 = vmatpush1.msra.mxu0 0.0
  %162 = vmatprep.subr.mxu0 0.0
  %163 = vmatpush1.msra.mxu0 0.0
  %164 = vmatprep.subr.mxu0 0.0
  %165 = vmatpush1.msra.mxu0 0.0
  %166 = vmatprep.subr.mxu0 0.0
  %167 = vmatpush1.msra.mxu0 0.0
  %168 = vmatprep.subr.mxu0 0.0
  %169 = vmatpush1.msra.mxu0 0.0
  %170 = vmatprep.subr.mxu0 0.0
  %171 = vmatpush1.msra.mxu0 0.0
  %172 = vmatprep.subr.mxu0 0.0
  %173 = vmatpush1.msra.mxu0 0.0
  %174 = vmatprep.subr.mxu0 0.0
  %175 = vmatpush1.msra.mxu0 0.0
  %176 = vmatprep.subr.mxu0 0.0
  %177 = vmatpush1.msra.mxu0 0.0
  %178 = vmatprep.subr.mxu0 0.0
  %179 = vmatpush1.msra.mxu0 0.0
  %180 = vmatprep.subr.mxu0 0.0
  %181 = vmatpush1.msra.mxu0 0.0
  %182 = vmatprep.subr.mxu0 0.0
  %183 = vmatpush1.msra.mxu0 0.0
  %184 = vmatprep.subr.mxu0 0.0
  %185 = vmatpush1.msra.mxu0 0.0
  %186 = vmatprep.subr.mxu0 0.0
  %187 = vmatpush1.msra.mxu0 0.0
  %188 = vmatprep.subr.mxu0 0.0
  %189 = vmatpush1.msra.mxu0 0.0
  %190 = vmatprep.mubr.f32.mxu0 0.0
  %191 = vmatmul.mubr.f32.gmra.mrb[0].mxu0 %v121
  %v192 = vpop.f32.mrb[0].mxu0
  %v193 = vadd.f32 %v101, %v192
  %v194 = vpop.f32.mrb[0].mxu0
  %195 = vmatprep.mubr.f32.mxu0 0.0
  %196 = vmatmul.mubr.f32.gmra.mrb[0].mxu0 %v124
  %v197 = vpop.f32.mrb[0].mxu0
  %v198 = vadd.f32 %v106, %v197
  %v199 = vpop.f32.mrb[0].mxu0
  %200 = vdwg.mxu0
  %v201 = vmin.f32 %v193, %v198
  %v202 = vrot.slane %v201, 4
  %v203 = vmin.f32 %v201, %v202
  %v204 = vrot.slane %v203, 2
  %v205 = vmin.f32 %v203, %v204
  %v206 = vrot.slane %v205, 1
  %v207 = vmin.f32 %v205, %v206
  %v208 = vsub.f32 %v193, %v207
  %v209 = vsub.f32 %v198, %v207
  %v210 = vsub.f32 0.0, %v208
  %v211 = vsub.f32 0.0, %v209
  %v212 = vmul.f32 %v210, 1.442695
  %v213 = vpow.pop %v212
  %v214 = vmul.f32 %v211, 1.442695
  %v215 = vpow.pop %v214
  %v216 = vmul.f32 %v213, %v111
  %v217 = vmul.f32 %v215, %v116
  %v218 = vadd.f32 %v216, %v217
  %v219 = vrot.slane %v218, 4
  %v220 = vadd.f32 %v218, %v219
  %v221 = vrot.slane %v220, 2
  %v222 = vadd.f32 %v220, %v221
  %v223 = vrot.slane %v222, 1
  %v224 = vadd.f32 %v222, %v223
  %v225 = vadd.f32 %v213, %v215
  %v226 = vrot.slane %v225, 4
  %v227 = vadd.f32 %v225, %v226
  %v228 = vrot.slane %v227, 2
  %v229 = vadd.f32 %v227, %v228
  %v230 = vrot.slane %v229, 1
  %v231 = vadd.f32 %v229, %v230
  %v232 = vrcp.pop %v231
  %v233 = vmul.f32 %v231, %v232
  %v234 = vsub.f32 2.0, %v233
  %v235 = vmul.f32 %v232, %v234
  %v236 = vmul.f32 %v224, %v235
  %237 = vst [vmem:[%s3] sm:$0x1] %v236
  // Predicated region
  $region14: #{bp_fnn_s_forward.1} parent=0 // pred_check
    _
  $region15: #{bp_fnn_s_forward.1} parent=0 // pred_check_branch
    %239 = sbr.rel (0) target = $region17
  $region16: #{bp_fnn_s_forward.1} parent=0 // pred_region
    _
  $region17: #{bp_fnn_s_forward.1} parent=0 // pred_fallthru
    _
  // Predicated region
  $region18: #{bp_fnn_s_forward.1} parent=0 // pred_check
    _
  $region19: #{bp_fnn_s_forward.1} parent=0 // pred_check_branch
    %241 = sbr.rel (0) target = $region21
  $region20: #{bp_fnn_s_forward.1} parent=0 // pred_region
    _
  $region21: #{bp_fnn_s_forward.1} parent=0 // pred_fallthru
    _

</llo_original>
